<compile_context>
chip_gen: v5e
topology: v5e:2x2
jax: 0.10.0
libtpu: 0.0.40
codegen_flags: <defaults>
</compile_context>

<pallas_src>
import jax
import jax.numpy as jnp
import numpy as np
from jax.experimental import pallas as pl
from jax.experimental.pallas import tpu as pltpu

NEG_INF = -1e30  # keep the masking constant in f32 (would overflow bf16)


# ------------------------- Fused kernel: GATConv + pool + MLP head ------------------------- #
def gat_fused_kernel(x_ref, adj_ref, memb_ref, news_ref,
                     w_gat_ref, att_src_ref, att_dst_ref, b_gat_ref,
                     w0_ref, b0_ref, w1a_ref, w1b_ref, b1_ref, w2_ref, b2_ref,
                     out_ref, attn_ref):
    # ---------------- GATConv (1 head) ----------------
    x = x_ref[...]                                                        # [N, F]
    xw = jnp.dot(x, w_gat_ref[...], preferred_element_type=jnp.float32)   # [N, H] (MXU)
    # TODO(synk): at production N, feed bf16 operands to the MXU (f32 accumulate) and tile
    # destination rows over a grid with double-buffered adj tiles (parallel axis for v7x).

    att_s = att_src_ref[...]                                              # [1, H]
    att_d = att_dst_ref[...]                                              # [1, H]
    # Lane-major source scores [1, N] straight off the MXU (no XLU transpose needed).
    a_src_row = jax.lax.dot_general(att_s, xw, (((1,), (1,)), ((), ())),
                                    preferred_element_type=jnp.float32)   # [1, N]
    a_dst_col = jax.lax.dot_general(xw, att_d, (((1,), (1,)), ((), ())),
                                    preferred_element_type=jnp.float32)   # [N, 1]

    # logits[i, j] = leaky_relu(a_dst[i] + a_src[j], negative_slope=0.2)
    logits = a_dst_col + a_src_row                                        # [N, N]
    logits = jnp.where(logits > 0, logits, 0.2 * logits)

    edge = adj_ref[...] > 0                                               # [N, N]
    masked = jnp.where(edge, logits, NEG_INF)
    m = jnp.max(masked, axis=-1, keepdims=True)
    e = jnp.where(edge, jnp.exp(masked - m), 0.0)
    denom = jnp.sum(e, axis=-1, keepdims=True)
    # Guard: a destination with no incoming edge (no self-loop) yields attn = 0, not NaN.
    inv = pl.reciprocal(jnp.where(denom > 0, denom, 1.0), approx=True)    # EUP slot
    attn = e * inv                                                        # softmax per destination
    attn_ref[...] = attn
    # TODO(synk): for large N on v5e, write attn as bf16 (or gather only per-edge alphas
    # in-kernel) to cut the O(N^2) visualization writeback.

    # TODO(synk): attention-coefficient dropout (training mode only) omitted (eval semantics).
    h = jnp.dot(attn, xw, preferred_element_type=jnp.float32) + b_gat_ref[...]
    h = jnp.maximum(h, 0.0)                                               # F.relu (+ identity dropout)

    # ---------------- per-graph max-pool (no [G, N, H] intermediate) ----------------
    memb = memb_ref[...]                                                  # [N, G] node-major one-hot
    num_graphs = memb.shape[1]                                            # static, small
    rows = []
    for g in range(num_graphs):
        mask_g = memb[:, g:g + 1] > 0                                     # [N, 1]
        rows.append(jnp.max(jnp.where(mask_g, h, NEG_INF), axis=0, keepdims=True))
    pooled = jnp.concatenate(rows, axis=0)                                # [G, H]

    # ---------------- concat MLP head + log_softmax ----------------
    news = jnp.dot(news_ref[...], w0_ref[...],
                   preferred_element_type=jnp.float32) + b0_ref[...]      # lin0
    news = jnp.maximum(news, 0.0)                                         # [G, H]

    # lin1 over concat([pooled, news], dim=1) done as a split matmul (avoids lane concat)
    z1 = (jnp.dot(pooled, w1a_ref[...], preferred_element_type=jnp.float32)
          + jnp.dot(news, w1b_ref[...], preferred_element_type=jnp.float32)
          + b1_ref[...])
    z1 = jnp.maximum(z1, 0.0)                                             # [G, H]

    logits2 = jnp.dot(z1, w2_ref[...],
                      preferred_element_type=jnp.float32) + b2_ref[...]   # [G, C]
    mm = jnp.max(logits2, axis=-1, keepdims=True)
    lse = jnp.log(jnp.sum(jnp.exp(logits2 - mm), axis=-1, keepdims=True)) + mm
    out_ref[...] = logits2 - lse                                          # log_softmax


# ------------------------------------ Wrapper ------------------------------------ #
def _vmem():
    return pl.BlockSpec(memory_space=pltpu.MemorySpace.VMEM)


@jax.jit
def gat_for_visualization(x, adj, memb_ng, news_x, params):
    N = x.shape[0]
    G = memb_ng.shape[1]
    C = params["w2"].shape[1]

    out, attn = pl.pallas_call(
        gat_fused_kernel,
        out_shape=(jax.ShapeDtypeStruct((G, C), jnp.float32),
                   jax.ShapeDtypeStruct((N, N), jnp.float32)),
        in_specs=[_vmem()] * 15,
        out_specs=(_vmem(), _vmem()),
    )(x, adj, memb_ng, news_x,
      params["w_gat"], params["att_src"], params["att_dst"], params["b_gat"],
      params["w0"], params["b0"], params["w1a"], params["w1b"], params["b1"],
      params["w2"], params["b2"])
    return out, attn


# ------------------------------- Pure-JAX reference ------------------------------- #
def reference(x, adj, memb_ng, news_x, params):
    xw = x @ params["w_gat"]
    a_s = jnp.sum(xw * params["att_src"], axis=-1)
    a_d = jnp.sum(xw * params["att_dst"], axis=-1)
    logit = a_d[:, None] + a_s[None, :]
    logit = jnp.where(logit > 0, logit, 0.2 * logit)
    logit = jnp.where(adj > 0, logit, -jnp.inf)
    attn = jax.nn.softmax(logit, axis=-1)
    attn = jnp.where(adj > 0, attn, 0.0)
    h = jnp.maximum(attn @ xw + params["b_gat"], 0.0)
    memb = memb_ng.T                                                      # [G, N]
    pooled = jnp.max(jnp.where(memb[:, :, None] > 0, h[None], -jnp.inf), axis=1)
    news = jnp.maximum(news_x @ params["w0"] + params["b0"], 0.0)
    z1 = jnp.maximum(pooled @ params["w1a"] + news @ params["w1b"] + params["b1"], 0.0)
    logits = z1 @ params["w2"] + params["b2"]
    return jax.nn.log_softmax(logits, axis=-1), attn


if __name__ == "__main__":
    # Small synthetic problem: 2 graphs x 8 nodes, num_features=16, nhid=32, num_classes=4
    N, F, H, G, C = 16, 16, 32, 2, 4
    key = jax.random.PRNGKey(0)
    k = jax.random.split(key, 12)

    # Node features and batch assignment (graph 0 = nodes 0..7, graph 1 = nodes 8..15)
    x = jax.random.normal(k[0], (N, F), dtype=jnp.float32)
    batch = np.repeat(np.arange(G), N // G)

    # Edges: bidirectional chain within each graph
    src, dst = [], []
    for g in range(G):
        base = g * (N // G)
        for i in range(N // G - 1):
            src += [base + i, base + i + 1]
            dst += [base + i + 1, base + i]
    edge_index = np.stack([np.array(src), np.array(dst)])                 # [2, E]

    # Dense adjacency adj[dst, src] = 1, plus self loops (PyG add_self_loops=True)
    adj_np = np.zeros((N, N), dtype=np.float32)
    adj_np[edge_index[1], edge_index[0]] = 1.0
    np.fill_diagonal(adj_np, 1.0)
    adj = jnp.asarray(adj_np)

    # Graph-membership one-hot, node-major [N, G]; first raw-feature row per graph ("news")
    memb_ng = jnp.asarray((batch[:, None] == np.arange(G)[None, :]).astype(np.float32))
    first_idx = np.array([np.nonzero(batch == g)[0][0] for g in range(G)])
    news_x = x[jnp.asarray(first_idx)]                                    # [G, F]

    # Deterministic parameter init (synthetic; shapes from the module's __init__)
    s = 0.1
    params = {
        "w_gat":   s * jax.random.normal(k[1],  (F, H), dtype=jnp.float32),
        "att_src": s * jax.random.normal(k[2],  (1, H), dtype=jnp.float32),
        "att_dst": s * jax.random.normal(k[3],  (1, H), dtype=jnp.float32),
        "b_gat":   s * jax.random.normal(k[4],  (1, H), dtype=jnp.float32),
        "w0":      s * jax.random.normal(k[5],  (F, H), dtype=jnp.float32),
        "b0":      s * jax.random.normal(k[6],  (1, H), dtype=jnp.float32),
        "w1a":     s * jax.random.normal(k[7],  (H, H), dtype=jnp.float32),  # lin1 rows for pooled
        "w1b":     s * jax.random.normal(k[8],  (H, H), dtype=jnp.float32),  # lin1 rows for news
        "b1":      s * jax.random.normal(k[9],  (1, H), dtype=jnp.float32),
        "w2":      s * jax.random.normal(k[10], (H, C), dtype=jnp.float32),
        "b2":      s * jax.random.normal(k[11], (1, C), dtype=jnp.float32),
    }

    out, attn_dense = gat_for_visualization(x, adj, memb_ng, news_x, params)
    out = jax.block_until_ready(out)
    attn_dense = jax.block_until_ready(attn_dense)

    # Per-edge attention weights (PyG returns (edge_index_with_self_loops, alpha))
    ei_sl = np.concatenate([edge_index, np.stack([np.arange(N), np.arange(N)])], axis=1)
    edge_alpha = attn_dense[jnp.asarray(ei_sl[1]), jnp.asarray(ei_sl[0])]
    edge_alpha = jax.block_until_ready(edge_alpha)

    # Correctness check vs pure-JAX reference (tolerance accounts for the EUP
    # approximate-reciprocal used in the kernel's softmax normalization).
    out_ref, attn_ref = reference(x, adj, memb_ng, news_x, params)
    assert np.allclose(np.asarray(out), np.asarray(out_ref), atol=1e-3, rtol=1e-3)
    assert np.allclose(np.asarray(attn_dense), np.asarray(attn_ref), atol=1e-3, rtol=1e-3)

    print("KERNEL_OK")
</pallas_src>

<mosaic_0001>
module attributes {stable_mosaic.version = 11 : i64} {
  func.func @gat_fused_kernel(%arg0: memref<16x16xf32, #tpu.memory_space<vmem>>, %arg1: memref<16x16xf32, #tpu.memory_space<vmem>>, %arg2: memref<16x2xf32, #tpu.memory_space<vmem>>, %arg3: memref<2x16xf32, #tpu.memory_space<vmem>>, %arg4: memref<16x32xf32, #tpu.memory_space<vmem>>, %arg5: memref<1x32xf32, #tpu.memory_space<vmem>>, %arg6: memref<1x32xf32, #tpu.memory_space<vmem>>, %arg7: memref<1x32xf32, #tpu.memory_space<vmem>>, %arg8: memref<16x32xf32, #tpu.memory_space<vmem>>, %arg9: memref<1x32xf32, #tpu.memory_space<vmem>>, %arg10: memref<32x32xf32, #tpu.memory_space<vmem>>, %arg11: memref<32x32xf32, #tpu.memory_space<vmem>>, %arg12: memref<1x32xf32, #tpu.memory_space<vmem>>, %arg13: memref<32x4xf32, #tpu.memory_space<vmem>>, %arg14: memref<1x4xf32, #tpu.memory_space<vmem>>, %arg15: memref<2x4xf32, #tpu.memory_space<vmem>>, %arg16: memref<16x16xf32, #tpu.memory_space<vmem>>) attributes {dimension_semantics = [], scalar_prefetch = 0 : i64, scratch_operands = 0 : i64, tpu.core_type = #tpu.core_type<tc>} {
    %c0 = arith.constant 0 : index
    %c0_0 = arith.constant 0 : index
    %0 = vector.load %arg0[%c0, %c0_0] : memref<16x16xf32, #tpu.memory_space<vmem>>, vector<16x16xf32>
    %c0_1 = arith.constant 0 : index
    %c0_2 = arith.constant 0 : index
    %1 = vector.load %arg4[%c0_1, %c0_2] : memref<16x32xf32, #tpu.memory_space<vmem>>, vector<16x32xf32>
    %cst = arith.constant dense<0.000000e+00> : vector<16x32xf32>
    %2 = tpu.matmul %0, %1, %cst {dimension_numbers = #tpu.dot_dimension_numbers<[1], [0], [0], [1], [0, 0, 1, 1], [], []>} : vector<16x16xf32>, vector<16x32xf32>, vector<16x32xf32> -> vector<16x32xf32>
    %c0_3 = arith.constant 0 : index
    %c0_4 = arith.constant 0 : index
    %3 = vector.load %arg5[%c0_3, %c0_4] : memref<1x32xf32, #tpu.memory_space<vmem>>, vector<1x32xf32>
    %c0_5 = arith.constant 0 : index
    %c0_6 = arith.constant 0 : index
    %4 = vector.load %arg6[%c0_5, %c0_6] : memref<1x32xf32, #tpu.memory_space<vmem>>, vector<1x32xf32>
    %cst_7 = arith.constant dense<0.000000e+00> : vector<1x16xf32>
    %5 = tpu.matmul %3, %2, %cst_7 {dimension_numbers = #tpu.dot_dimension_numbers<[1], [1], [0], [0], [0, 0, 1, 0], [], []>} : vector<1x32xf32>, vector<16x32xf32>, vector<1x16xf32> -> vector<1x16xf32>
    %cst_8 = arith.constant dense<0.000000e+00> : vector<16x1xf32>
    %6 = tpu.matmul %2, %4, %cst_8 {dimension_numbers = #tpu.dot_dimension_numbers<[1], [1], [0], [0], [0, 0, 1, 0], [], []>} : vector<16x32xf32>, vector<1x32xf32>, vector<16x1xf32> -> vector<16x1xf32>
    %7 = vector.broadcast %6 : vector<16x1xf32> to vector<16x16xf32>
    %8 = vector.broadcast %5 : vector<1x16xf32> to vector<16x16xf32>
    %9 = arith.addf %7, %8 : vector<16x16xf32>
    %cst_9 = arith.constant 0.000000e+00 : f32
    %10 = vector.broadcast %cst_9 : f32 to vector<16x16xf32>
    %11 = arith.cmpf ogt, %9, %10 : vector<16x16xf32>
    %cst_10 = arith.constant 2.000000e-01 : f32
    %12 = vector.broadcast %cst_10 : f32 to vector<16x16xf32>
    %13 = arith.mulf %12, %9 : vector<16x16xf32>
    %14 = arith.select %11, %9, %13 : vector<16x16xi1>, vector<16x16xf32>
    %c0_11 = arith.constant 0 : index
    %c0_12 = arith.constant 0 : index
    %15 = vector.load %arg1[%c0_11, %c0_12] : memref<16x16xf32, #tpu.memory_space<vmem>>, vector<16x16xf32>
    %cst_13 = arith.constant 0.000000e+00 : f32
    %16 = vector.broadcast %cst_13 : f32 to vector<16x16xf32>
    %17 = arith.cmpf ogt, %15, %16 : vector<16x16xf32>
    %cst_14 = arith.constant -1.000000e+30 : f32
    %18 = vector.broadcast %cst_14 : f32 to vector<16x16xf32>
    %19 = arith.select %17, %14, %18 : vector<16x16xi1>, vector<16x16xf32>
    %cst_15 = arith.constant dense<0xFF800000> : vector<16xf32>
    %20 = vector.multi_reduction <maximumf>, %19, %cst_15 [1] : vector<16x16xf32> to vector<16xf32>
    %21 = vector.shape_cast %20 : vector<16xf32> to vector<16x1xf32>
    %22 = vector.broadcast %21 : vector<16x1xf32> to vector<16x16xf32>
    %23 = arith.subf %19, %22 : vector<16x16xf32>
    %24 = math.exp %23 : vector<16x16xf32>
    %cst_16 = arith.constant 0.000000e+00 : f32
    %25 = vector.broadcast %cst_16 : f32 to vector<16x16xf32>
    %26 = arith.select %17, %24, %25 : vector<16x16xi1>, vector<16x16xf32>
    %cst_17 = arith.constant dense<0.000000e+00> : vector<16xf32>
    %27 = vector.multi_reduction <add>, %26, %cst_17 [1] : vector<16x16xf32> to vector<16xf32>
    %28 = vector.shape_cast %27 : vector<16xf32> to vector<16x1xf32>
    %cst_18 = arith.constant 0.000000e+00 : f32
    %29 = vector.broadcast %cst_18 : f32 to vector<16x1xf32>
    %30 = arith.cmpf ogt, %28, %29 : vector<16x1xf32>
    %cst_19 = arith.constant 1.000000e+00 : f32
    %31 = vector.broadcast %cst_19 : f32 to vector<16x1xf32>
    %32 = arith.select %30, %28, %31 : vector<16x1xi1>, vector<16x1xf32>
    %33 = tpu.reciprocal %32 {approx = true} : vector<16x1xf32> -> vector<16x1xf32>
    %34 = vector.broadcast %33 : vector<16x1xf32> to vector<16x16xf32>
    %35 = arith.mulf %26, %34 : vector<16x16xf32>
    %c0_20 = arith.constant 0 : index
    %c0_21 = arith.constant 0 : index
    %36 = vector.load %arg16[%c0_20, %c0_21] : memref<16x16xf32, #tpu.memory_space<vmem>>, vector<16x16xf32>
    tpu.vector_store %arg16[%c0_20, %c0_21], %35 {strides = array<i32>} : memref<16x16xf32, #tpu.memory_space<vmem>>, vector<16x16xf32>,
    %cst_22 = arith.constant dense<0.000000e+00> : vector<16x32xf32>
    %37 = tpu.matmul %35, %2, %cst_22 {dimension_numbers = #tpu.dot_dimension_numbers<[1], [0], [0], [1], [0, 0, 1, 1], [], []>} : vector<16x16xf32>, vector<16x32xf32>, vector<16x32xf32> -> vector<16x32xf32>
    %c0_23 = arith.constant 0 : index
    %c0_24 = arith.constant 0 : index
    %38 = vector.load %arg7[%c0_23, %c0_24] : memref<1x32xf32, #tpu.memory_space<vmem>>, vector<1x32xf32>
    %39 = vector.broadcast %38 : vector<1x32xf32> to vector<16x32xf32>
    %40 = arith.addf %37, %39 : vector<16x32xf32>
    %cst_25 = arith.constant 0.000000e+00 : f32
    %41 = vector.broadcast %cst_25 : f32 to vector<16x32xf32>
    %42 = arith.maximumf %40, %41 : vector<16x32xf32>
    %c0_26 = arith.constant 0 : index
    %c0_27 = arith.constant 0 : index
    %43 = vector.load %arg2[%c0_26, %c0_27] : memref<16x2xf32, #tpu.memory_space<vmem>>, vector<16x2xf32>
    %44 = vector.extract_strided_slice %43 {offsets = [0, 0], sizes = [16, 1], strides = [1, 1]} : vector<16x2xf32> to vector<16x1xf32>
    %cst_28 = arith.constant 0.000000e+00 : f32
    %45 = vector.broadcast %cst_28 : f32 to vector<16x1xf32>
    %46 = arith.cmpf ogt, %44, %45 : vector<16x1xf32>
    %cst_29 = arith.constant -1.000000e+30 : f32
    %47 = vector.shape_cast %46 : vector<16x1xi1> to vector<16x1xi1>
    %48 = vector.broadcast %47 : vector<16x1xi1> to vector<16x32xi1>
    %49 = vector.broadcast %cst_29 : f32 to vector<16x32xf32>
    %50 = arith.select %48, %42, %49 : vector<16x32xi1>, vector<16x32xf32>
    %cst_30 = arith.constant dense<0xFF800000> : vector<32xf32>
    %51 = vector.multi_reduction <maximumf>, %50, %cst_30 [0] : vector<16x32xf32> to vector<32xf32>
    %52 = vector.shape_cast %51 : vector<32xf32> to vector<1x32xf32>
    %53 = vector.extract_strided_slice %43 {offsets = [0, 1], sizes = [16, 1], strides = [1, 1]} : vector<16x2xf32> to vector<16x1xf32>
    %cst_31 = arith.constant 0.000000e+00 : f32
    %54 = vector.broadcast %cst_31 : f32 to vector<16x1xf32>
    %55 = arith.cmpf ogt, %53, %54 : vector<16x1xf32>
    %cst_32 = arith.constant -1.000000e+30 : f32
    %56 = vector.shape_cast %55 : vector<16x1xi1> to vector<16x1xi1>
    %57 = vector.broadcast %56 : vector<16x1xi1> to vector<16x32xi1>
    %58 = vector.broadcast %cst_32 : f32 to vector<16x32xf32>
    %59 = arith.select %57, %42, %58 : vector<16x32xi1>, vector<16x32xf32>
    %cst_33 = arith.constant dense<0xFF800000> : vector<32xf32>
    %60 = vector.multi_reduction <maximumf>, %59, %cst_33 [0] : vector<16x32xf32> to vector<32xf32>
    %61 = vector.shape_cast %60 : vector<32xf32> to vector<1x32xf32>
    %62 = tpu.concatenate %52, %61 in 0 : vector<1x32xf32>, vector<1x32xf32> -> vector<2x32xf32>
    %c0_34 = arith.constant 0 : index
    %c0_35 = arith.constant 0 : index
    %63 = vector.load %arg3[%c0_34, %c0_35] : memref<2x16xf32, #tpu.memory_space<vmem>>, vector<2x16xf32>
    %c0_36 = arith.constant 0 : index
    %c0_37 = arith.constant 0 : index
    %64 = vector.load %arg8[%c0_36, %c0_37] : memref<16x32xf32, #tpu.memory_space<vmem>>, vector<16x32xf32>
    %cst_38 = arith.constant dense<0.000000e+00> : vector<2x32xf32>
    %65 = tpu.matmul %63, %64, %cst_38 {dimension_numbers = #tpu.dot_dimension_numbers<[1], [0], [0], [1], [0, 0, 1, 1], [], []>} : vector<2x16xf32>, vector<16x32xf32>, vector<2x32xf32> -> vector<2x32xf32>
    %c0_39 = arith.constant 0 : index
    %c0_40 = arith.constant 0 : index
    %66 = vector.load %arg9[%c0_39, %c0_40] : memref<1x32xf32, #tpu.memory_space<vmem>>, vector<1x32xf32>
    %67 = vector.broadcast %66 : vector<1x32xf32> to vector<2x32xf32>
    %68 = arith.addf %65, %67 : vector<2x32xf32>
    %cst_41 = arith.constant 0.000000e+00 : f32
    %69 = vector.broadcast %cst_41 : f32 to vector<2x32xf32>
    %70 = arith.maximumf %68, %69 : vector<2x32xf32>
    %c0_42 = arith.constant 0 : index
    %c0_43 = arith.constant 0 : index
    %71 = vector.load %arg10[%c0_42, %c0_43] : memref<32x32xf32, #tpu.memory_space<vmem>>, vector<32x32xf32>
    %cst_44 = arith.constant dense<0.000000e+00> : vector<2x32xf32>
    %72 = tpu.matmul %62, %71, %cst_44 {dimension_numbers = #tpu.dot_dimension_numbers<[1], [0], [0], [1], [0, 0, 1, 1], [], []>} : vector<2x32xf32>, vector<32x32xf32>, vector<2x32xf32> -> vector<2x32xf32>
    %c0_45 = arith.constant 0 : index
    %c0_46 = arith.constant 0 : index
    %73 = vector.load %arg11[%c0_45, %c0_46] : memref<32x32xf32, #tpu.memory_space<vmem>>, vector<32x32xf32>
    %cst_47 = arith.constant dense<0.000000e+00> : vector<2x32xf32>
    %74 = tpu.matmul %70, %73, %cst_47 {dimension_numbers = #tpu.dot_dimension_numbers<[1], [0], [0], [1], [0, 0, 1, 1], [], []>} : vector<2x32xf32>, vector<32x32xf32>, vector<2x32xf32> -> vector<2x32xf32>
    %75 = arith.addf %72, %74 : vector<2x32xf32>
    %c0_48 = arith.constant 0 : index
    %c0_49 = arith.constant 0 : index
    %76 = vector.load %arg12[%c0_48, %c0_49] : memref<1x32xf32, #tpu.memory_space<vmem>>, vector<1x32xf32>
    %77 = vector.broadcast %76 : vector<1x32xf32> to vector<2x32xf32>
    %78 = arith.addf %75, %77 : vector<2x32xf32>
    %cst_50 = arith.constant 0.000000e+00 : f32
    %79 = vector.broadcast %cst_50 : f32 to vector<2x32xf32>
    %80 = arith.maximumf %78, %79 : vector<2x32xf32>
    %c0_51 = arith.constant 0 : index
    %c0_52 = arith.constant 0 : index
    %81 = vector.load %arg13[%c0_51, %c0_52] : memref<32x4xf32, #tpu.memory_space<vmem>>, vector<32x4xf32>
    %cst_53 = arith.constant dense<0.000000e+00> : vector<2x4xf32>
    %82 = tpu.matmul %80, %81, %cst_53 {dimension_numbers = #tpu.dot_dimension_numbers<[1], [0], [0], [1], [0, 0, 1, 1], [], []>} : vector<2x32xf32>, vector<32x4xf32>, vector<2x4xf32> -> vector<2x4xf32>
    %c0_54 = arith.constant 0 : index
    %c0_55 = arith.constant 0 : index
    %83 = vector.load %arg14[%c0_54, %c0_55] : memref<1x4xf32, #tpu.memory_space<vmem>>, vector<1x4xf32>
    %84 = vector.broadcast %83 : vector<1x4xf32> to vector<2x4xf32>
    %85 = arith.addf %82, %84 : vector<2x4xf32>
    %cst_56 = arith.constant dense<0xFF800000> : vector<2xf32>
    %86 = vector.multi_reduction <maximumf>, %85, %cst_56 [1] : vector<2x4xf32> to vector<2xf32>
    %87 = vector.shape_cast %86 : vector<2xf32> to vector<2x1xf32>
    %88 = vector.broadcast %87 : vector<2x1xf32> to vector<2x4xf32>
    %89 = arith.subf %85, %88 : vector<2x4xf32>
    %90 = math.exp %89 : vector<2x4xf32>
    %cst_57 = arith.constant dense<0.000000e+00> : vector<2xf32>
    %91 = vector.multi_reduction <add>, %90, %cst_57 [1] : vector<2x4xf32> to vector<2xf32>
    %92 = vector.shape_cast %91 : vector<2xf32> to vector<2x1xf32>
    %93 = math.log %92 : vector<2x1xf32>
    %94 = arith.addf %93, %87 : vector<2x1xf32>
    %95 = vector.broadcast %94 : vector<2x1xf32> to vector<2x4xf32>
    %96 = arith.subf %85, %95 : vector<2x4xf32>
    %c0_58 = arith.constant 0 : index
    %c0_59 = arith.constant 0 : index
    %97 = vector.load %arg15[%c0_58, %c0_59] : memref<2x4xf32, #tpu.memory_space<vmem>>, vector<2x4xf32>
    tpu.vector_store %arg15[%c0_58, %c0_59], %96 {strides = array<i32>} : memref<2x4xf32, #tpu.memory_space<vmem>>, vector<2x4xf32>,
    return
  }
}

</mosaic_0001>

<llo_original>
// kernel: gat_for_visualization.1
$region0: #{gat_for_visualization.1}
  #allocation0 [shape = 'u32[]', space=smem, size = 0x4, offset = 0x4, fixed_abs, tag = 'smem constant byte address 0x4 - core index']
  #allocation1 [shape = 'u32[72,128]{1,0:T(1,128)}', space=vmem, size = 0x9000, scoped, tag = 'internal scratch']
  %s0 = inlined_call_operand.vmem [shape: f32[16,16], index: 0, kind: input, shape index: {}]
  %s1 = inlined_call_operand.hbm [shape: f32[16,16], index: 1, kind: input, shape index: {}]
  %s2 = inlined_call_operand.vmem [shape: f32[16,2], index: 2, kind: input, shape index: {}]
  %s3 = inlined_call_operand.vmem [shape: f32[2,16], index: 3, kind: input, shape index: {}]
  %s4 = inlined_call_operand.hbm [shape: f32[16,32], index: 4, kind: input, shape index: {}]
  %s5 = inlined_call_operand.vmem [shape: f32[1,32], index: 5, kind: input, shape index: {}]
  %s6 = inlined_call_operand.vmem [shape: f32[1,32], index: 6, kind: input, shape index: {}]
  %s7 = inlined_call_operand.vmem [shape: f32[1,32], index: 7, kind: input, shape index: {}]
  %s8 = inlined_call_operand.hbm [shape: f32[16,32], index: 8, kind: input, shape index: {}]
  %s9 = inlined_call_operand.vmem [shape: f32[1,32], index: 9, kind: input, shape index: {}]
  %s10 = inlined_call_operand.vmem [shape: f32[32,32], index: 10, kind: input, shape index: {}]
  %s11 = inlined_call_operand.hbm [shape: f32[32,32], index: 11, kind: input, shape index: {}]
  %s12 = inlined_call_operand.vmem [shape: f32[1,32], index: 12, kind: input, shape index: {}]
  %s13 = inlined_call_operand.vmem [shape: f32[32,4], index: 13, kind: input, shape index: {}]
  %s14 = inlined_call_operand.vmem [shape: f32[1,4], index: 14, kind: input, shape index: {}]
  %s15 = inlined_call_operand.hbm [shape: f32[2,4], index: 15, kind: output, shape index: {0}]
  %s16 = inlined_call_operand.hbm [shape: f32[16,16], index: 16, kind: output, shape index: {1}]
  %17 = xla_tuple %s15, %s16
  %s18 = sld [smem:[#allocation0]]
  $region94: #{gat_for_visualization.1} parent=0
    _
  %s20 = ssub.s32 1, %s18
  %s21 = scalar_select 0, %s20, %s18
  $region1: #{gat_for_visualization.1} parent=0
    #allocation2 [shape = 'u8[8192]{0}', space=vmem, size = 0x2000, scoped, tag = 'input window, operand 1, single buffered']
    #allocation3 [shape = 's32[1]{0}', space=sflag, size = 0x4, scoped, tag = 'scoped memory for gat_for_visualization.1']
    #allocation4 [shape = 's32[1]{0}', space=sflag, size = 0x4, scoped, tag = 'scoped memory for gat_for_visualization.1']
    #allocation5 [shape = 'u8[8192]{0}', space=vmem, size = 0x2000, scoped, tag = 'input window, operand 4, single buffered']
    #allocation6 [shape = 's32[1]{0}', space=sflag, size = 0x4, scoped, tag = 'scoped memory for gat_for_visualization.1']
    #allocation7 [shape = 'u8[8192]{0}', space=vmem, size = 0x2000, scoped, tag = 'input window, operand 8, single buffered']
    #allocation8 [shape = 'u8[16384]{0}', space=vmem, size = 0x4000, scoped, tag = 'input window, operand 11, single buffered']
    #allocation9 [shape = 's32[1]{0}', space=sflag, size = 0x4, scoped, tag = 'scoped memory for gat_for_visualization.1']
    #allocation10 [shape = 'u8[1024]{0}', space=vmem, size = 0x400, scoped, tag = 'output window, operand 0, single buffered']
    #allocation11 [shape = 'u8[8192]{0}', space=vmem, size = 0x2000, scoped, tag = 'output window, operand 1, single buffered']
    #allocation12 [shape = 's32[1]{0}', space=sflag, size = 0x4, scoped, tag = 'scoped memory for gat_for_visualization.1']
    %22 = vsyncpa [#allocation3], 0
    %23 = vsyncpa [#allocation6], 0
    %24 = vsyncpa [#allocation9], 0
    %25 = vsyncpa [#allocation4], 0
    %26 = vsyncpa [#allocation12], 0
    // Predicated region
    $region2: #{gat_for_visualization.1} parent=1 // pred_check
      _
    $region3: #{gat_for_visualization.1} parent=1 // pred_check_branch
      %28 = sbr.rel (0) target = $region5
    $region4: #{gat_for_visualization.1} parent=1 // pred_region
      _
    $region5: #{gat_for_visualization.1} parent=1 // pred_fallthru
      _
    // Predicated region
    $region6: #{gat_for_visualization.1} parent=1 // pred_check
      _
    $region7: #{gat_for_visualization.1} parent=1 // pred_check_branch
      %30 = sbr.rel (0) target = $region9
    $region8: #{gat_for_visualization.1} parent=1 // pred_region
      %32 = vsyncadd [#allocation3], 0
      %s33 = sshll.u32 %s1, 4
      %s34 = int_to_ptr.hbm [resolvable:$true] %s33
      %s35 = sshll.u32 [#allocation2], 4
      %s36 = int_to_ptr.vmem [resolvable:$true] %s35
      %41 = dma.hbm_to_vmem [thread:$0]  %s34, 256, %s36, [#allocation3], 128, 128, 8
    $region9: #{gat_for_visualization.1} parent=1 // pred_fallthru
      _
    // Predicated region
    $region10: #{gat_for_visualization.1} parent=1 // pred_check
      _
    $region11: #{gat_for_visualization.1} parent=1 // pred_check_branch
      %43 = sbr.rel (0) target = $region13
    $region12: #{gat_for_visualization.1} parent=1 // pred_region
      _
    $region13: #{gat_for_visualization.1} parent=1 // pred_fallthru
      _
    // Predicated region
    $region14: #{gat_for_visualization.1} parent=1 // pred_check
      _
    $region15: #{gat_for_visualization.1} parent=1 // pred_check_branch
      %45 = sbr.rel (0) target = $region17
    $region16: #{gat_for_visualization.1} parent=1 // pred_region
      _
    $region17: #{gat_for_visualization.1} parent=1 // pred_fallthru
      _
    // Predicated region
    $region18: #{gat_for_visualization.1} parent=1 // pred_check
      _
    $region19: #{gat_for_visualization.1} parent=1 // pred_check_branch
      %47 = sbr.rel (0) target = $region21
    $region20: #{gat_for_visualization.1} parent=1 // pred_region
      %49 = vsyncadd [#allocation6], 0
      %s50 = sshll.u32 %s4, 4
      %s51 = int_to_ptr.hbm [resolvable:$true] %s50
      %s52 = sshll.u32 [#allocation5], 4
      %s53 = int_to_ptr.vmem [resolvable:$true] %s52
      %58 = dma.hbm_to_vmem [thread:$0]  %s51, 256, %s53, [#allocation6], 128, 128, 8
    $region21: #{gat_for_visualization.1} parent=1 // pred_fallthru
      _
    // Predicated region
    $region22: #{gat_for_visualization.1} parent=1 // pred_check
      _
    $region23: #{gat_for_visualization.1} parent=1 // pred_check_branch
      %60 = sbr.rel (0) target = $region25
    $region24: #{gat_for_visualization.1} parent=1 // pred_region
      _
    $region25: #{gat_for_visualization.1} parent=1 // pred_fallthru
      _
    // Predicated region
    $region26: #{gat_for_visualization.1} parent=1 // pred_check
      _
    $region27: #{gat_for_visualization.1} parent=1 // pred_check_branch
      %62 = sbr.rel (0) target = $region29
    $region28: #{gat_for_visualization.1} parent=1 // pred_region
      _
    $region29: #{gat_for_visualization.1} parent=1 // pred_fallthru
      _
    // Predicated region
    $region30: #{gat_for_visualization.1} parent=1 // pred_check
      _
    $region31: #{gat_for_visualization.1} parent=1 // pred_check_branch
      %64 = sbr.rel (0) target = $region33
    $region32: #{gat_for_visualization.1} parent=1 // pred_region
      _
    $region33: #{gat_for_visualization.1} parent=1 // pred_fallthru
      _
    // Predicated region
    $region34: #{gat_for_visualization.1} parent=1 // pred_check
      _
    $region35: #{gat_for_visualization.1} parent=1 // pred_check_branch
      %66 = sbr.rel (0) target = $region37
    $region36: #{gat_for_visualization.1} parent=1 // pred_region
      %68 = vsyncadd [#allocation6], 0
      %s69 = sshll.u32 %s8, 4
      %s70 = int_to_ptr.hbm [resolvable:$true] %s69
      %s71 = sshll.u32 [#allocation7], 4
      %s72 = int_to_ptr.vmem [resolvable:$true] %s71
      %77 = dma.hbm_to_vmem [thread:$0]  %s70, 256, %s72, [#allocation6], 128, 128, 8
    $region37: #{gat_for_visualization.1} parent=1 // pred_fallthru
      _
    // Predicated region
    $region38: #{gat_for_visualization.1} parent=1 // pred_check
      _
    $region39: #{gat_for_visualization.1} parent=1 // pred_check_branch
      %79 = sbr.rel (0) target = $region41
    $region40: #{gat_for_visualization.1} parent=1 // pred_region
      _
    $region41: #{gat_for_visualization.1} parent=1 // pred_fallthru
      _
    // Predicated region
    $region42: #{gat_for_visualization.1} parent=1 // pred_check
      _
    $region43: #{gat_for_visualization.1} parent=1 // pred_check_branch
      %81 = sbr.rel (0) target = $region45
    $region44: #{gat_for_visualization.1} parent=1 // pred_region
      _
    $region45: #{gat_for_visualization.1} parent=1 // pred_fallthru
      _
    // Predicated region
    $region46: #{gat_for_visualization.1} parent=1 // pred_check
      _
    $region47: #{gat_for_visualization.1} parent=1 // pred_check_branch
      %83 = sbr.rel (0) target = $region49
    $region48: #{gat_for_visualization.1} parent=1 // pred_region
      %85 = vsyncadd [#allocation9], 0
      %s86 = sshll.u32 %s11, 4
      %s87 = int_to_ptr.hbm [resolvable:$true] %s86
      %s88 = sshll.u32 [#allocation8], 4
      %s89 = int_to_ptr.vmem [resolvable:$true] %s88
      %94 = dma.hbm_to_vmem [thread:$0]  %s87, 512, %s89, [#allocation9], 128, 128, 8
    $region49: #{gat_for_visualization.1} parent=1 // pred_fallthru
      _
    // Predicated region
    $region50: #{gat_for_visualization.1} parent=1 // pred_check
      _
    $region51: #{gat_for_visualization.1} parent=1 // pred_check_branch
      %96 = sbr.rel (0) target = $region53
    $region52: #{gat_for_visualization.1} parent=1 // pred_region
      _
    $region53: #{gat_for_visualization.1} parent=1 // pred_fallthru
      _
    // Predicated region
    $region54: #{gat_for_visualization.1} parent=1 // pred_check
      _
    $region55: #{gat_for_visualization.1} parent=1 // pred_check_branch
      %98 = sbr.rel (0) target = $region57
    $region56: #{gat_for_visualization.1} parent=1 // pred_region
      _
    $region57: #{gat_for_visualization.1} parent=1 // pred_fallthru
      _
    // Predicated region
    $region58: #{gat_for_visualization.1} parent=1 // pred_check
      _
    $region59: #{gat_for_visualization.1} parent=1 // pred_check_branch
      %100 = sbr.rel (0) target = $region61
    $region60: #{gat_for_visualization.1} parent=1 // pred_region
      _
    $region61: #{gat_for_visualization.1} parent=1 // pred_fallthru
      _
    // Predicated region
    $region62: #{gat_for_visualization.1} parent=1 // pred_check
      _
    $region63: #{gat_for_visualization.1} parent=1 // pred_check_branch
      %102 = sbr.rel (0) target = $region65
    $region64: #{gat_for_visualization.1} parent=1 // pred_region
      %104 = dma.done [#allocation3], 256
    $region65: #{gat_for_visualization.1} parent=1 // pred_fallthru
      _
    // Predicated region
    $region66: #{gat_for_visualization.1} parent=1 // pred_check
      _
    $region67: #{gat_for_visualization.1} parent=1 // pred_check_branch
      %106 = sbr.rel (0) target = $region69
    $region68: #{gat_for_visualization.1} parent=1 // pred_region
      %108 = dma.done [#allocation6], 256
    $region69: #{gat_for_visualization.1} parent=1 // pred_fallthru
      _
    // Predicated region
    $region70: #{gat_for_visualization.1} parent=1 // pred_check
      _
    $region71: #{gat_for_visualization.1} parent=1 // pred_check_branch
      %110 = sbr.rel (0) target = $region73
    $region72: #{gat_for_visualization.1} parent=1 // pred_region
      %112 = dma.done [#allocation6], 256
    $region73: #{gat_for_visualization.1} parent=1 // pred_fallthru
      _
    // Predicated region
    $region74: #{gat_for_visualization.1} parent=1 // pred_check
      _
    $region75: #{gat_for_visualization.1} parent=1 // pred_check_branch
      %114 = sbr.rel (0) target = $region77
    $region76: #{gat_for_visualization.1} parent=1 // pred_region
      %116 = dma.done [#allocation9], 512
    $region77: #{gat_for_visualization.1} parent=1 // pred_fallthru
      _
    %v117 = vld [vmem:[%s0] sm:$0xff]
    %v118 = vld [vmem:[%s0 + $0x8] sm:$0xff]
    %v119 = vld [vmem:[#allocation5] sm:$0xff]
    %v120 = vld [vmem:[#allocation5 + $0x8] sm:$0xff]
    %vm121 = vcmask 130048
    %v123 = vsel %vm121, %v117, 0
    %v126 = vsel %vm121, %v118, 0
    %128 = vmatpush.msra.mxu0 0.0
    %129 = vmatpush.msra.mxu0 0.0
    %130 = vmatpush.msra.mxu0 0.0
    %131 = vmatpush.msra.mxu0 0.0
    %132 = vmatpush.msra.mxu0 0.0
    %133 = vmatpush.msra.mxu0 0.0
    %134 = vmatpush.msra.mxu0 0.0
    %135 = vmatpush.msra.mxu0 0.0
    %136 = vmatpush.msra.mxu0 0.0
    %137 = vmatpush.msra.mxu0 0.0
    %138 = vmatpush.msra.mxu0 0.0
    %139 = vmatpush.msra.mxu0 0.0
    %140 = vmatpush.msra.mxu0 0.0
    %141 = vmatpush.msra.mxu0 0.0
    %142 = vmatpush.msra.mxu0 %v120
    %143 = vmatpush.msra.mxu0 %v119
    %144 = vmatmul.f32.gmra.mxu0 %v123
    %v145 = vpop.f32.mrf.mxu0
    %v146 = vadd.f32 0.0, %v145
    %147 = vmatmul.f32.gmra.mxu0 %v126
    %v148 = vpop.f32.mrf.mxu0
    %v149 = vadd.f32 0.0, %v148
    %150 = vdwg.mxu0
    %v151 = vld [vmem:[%s5] sm:$0x1]
    %v152 = vld [vmem:[%s6] sm:$0x1]
    %vm153 = vcmask 261120
    %v155 = vsel %vm153, %v151, 0
    %v158 = vsel %vm153, %v146, 0
    %v161 = vsel %vm153, %v149, 0
    %163 = vmatpush.xpose.msra.mxu0 0.0
    %164 = vmatpush.xpose.msra.mxu0 0.0
    %165 = vmatpush.xpose.msra.mxu0 0.0
    %166 = vmatpush.xpose.msra.mxu0 0.0
    %167 = vmatpush.xpose.msra.mxu0 0.0
    %168 = vmatpush.xpose.msra.mxu0 0.0
    %169 = vmatpush.xpose.msra.mxu0 0.0
    %170 = vmatpush.xpose.msra.mxu0 0.0
    %171 = vmatpush.xpose.msra.mxu0 0.0
    %172 = vmatpush.xpose.msra.mxu0 0.0
    %173 = vmatpush.xpose.msra.mxu0 0.0
    %174 = vmatpush.xpose.msra.mxu0 0.0
    %175 = vmatpush.xpose.msra.mxu0 0.0
    %176 = vmatpush.xpose.msra.mxu0 0.0
    %177 = vmatpush.xpose.msra.mxu0 %v161
    %178 = vmatpush.xpose.msra.mxu0 %v158
    %179 = vmatmul.f32.gmra.mxu0 %v155
    %v180 = vpop.f32.mrf.mxu0
    %v181 = vadd.f32 0.0, %v180
    %182 = vdwg.mxu0
    %v184 = vperm.slane %v152, 0
    %v186 = vmul.f32 %v146, %v184
    %v187 = vmul.f32 %v149, %v184
    %v188 = vsel %vm153, %v186, 0.0
    %189 = vadd.xlane.f32.xlu0 %v188
    %v190 = vpop.xlane.xlu0 %189
    %v191 = vsel %vm153, %v187, 0.0
    %192 = vadd.xlane.f32.xlu0 %v191
    %v193 = vpop.xlane.xlu0 %192
    %v194 = vperm.slane %v181, 0
    %v195 = vadd.f32 %v190, %v194
    %v196 = vadd.f32 %v193, %v194
    %vm197 = vcmp.gt.f32.partialorder %v195, 0.0
    %vm198 = vcmp.gt.f32.partialorder %v196, 0.0
    %v199 = vmul.f32 %v195, 0.2
    %v200 = vmul.f32 %v196, 0.2
    %v201 = vsel %vm197, %v195, %v199
    %v202 = vsel %vm198, %v196, %v200
    %v203 = vld [vmem:[#allocation2] sm:$0xff]
    %v204 = vld [vmem:[#allocation2 + $0x8] sm:$0xff]
    %vm205 = vcmp.gt.f32.partialorder %v203, 0.0
    %vm206 = vcmp.gt.f32.partialorder %v204, 0.0
    %v207 = vsel %vm205, %v201, -1e+30
    %v208 = vsel %vm206, %v202, -1e+30
    %v209 = vsel %vm121, %v207, -inf
    %210 = vmax.xlane.f32.xlu0 %v209
    %v211 = vpop.xlane.xlu0 %210
    %v212 = vsel %vm121, %v208, -inf
    %213 = vmax.xlane.f32.xlu0 %v212
    %v214 = vpop.xlane.xlu0 %213
    %v215 = vsub.f32 %v207, %v211
    %v216 = vsub.f32 %v208, %v214
    %v217 = vmul.f32 %v215, 1.442695
    %v218 = vpow.pop %v217
    %v219 = vmul.f32 %v216, 1.442695
    %v220 = vpow.pop %v219
    %v221 = vsel %vm205, %v218, 0.0
    %v222 = vsel %vm206, %v220, 0.0
    %v223 = vsel %vm121, %v221, 0.0
    %224 = vadd.xlane.f32.xlu0 %v223
    %v225 = vpop.xlane.xlu0 %224
    %v226 = vsel %vm121, %v222, 0.0
    %227 = vadd.xlane.f32.xlu0 %v226
    %v228 = vpop.xlane.xlu0 %227
    %vm229 = vcmp.gt.f32.partialorder %v225, 0.0
    %vm230 = vcmp.gt.f32.partialorder %v228, 0.0
    %v231 = vsel %vm229, %v225, 1.0
    %v232 = vsel %vm230, %v228, 1.0
    %v233 = vrcp.pop %v231
    %v234 = vrcp.pop %v232
    %v235 = vmul.f32 %v221, %v233
    %v236 = vmul.f32 %v222, %v234
    %237 = vst.msk [vmem:[#allocation11] sm:$0xff] %vm121, %v235
    %238 = vst.msk [vmem:[#allocation11 + $0x8] sm:$0xff] %vm121, %v236
    %v239 = vld [vmem:[%s7] sm:$0x1]
    %v241 = vperm.slane %v239, 0
    %v244 = vsel %vm121, %v235, 0
    %v247 = vsel %vm121, %v236, 0
    %249 = vmatpush.msra.mxu0 0.0
    %250 = vmatpush.msra.mxu0 0.0
    %251 = vmatpush.msra.mxu0 0.0
    %252 = vmatpush.msra.mxu0 0.0
    %253 = vmatpush.msra.mxu0 0.0
    %254 = vmatpush.msra.mxu0 0.0
    %255 = vmatpush.msra.mxu0 0.0
    %256 = vmatpush.msra.mxu0 0.0
    %257 = vmatpush.msra.mxu0 0.0
    %258 = vmatpush.msra.mxu0 0.0
    %259 = vmatpush.msra.mxu0 0.0
    %260 = vmatpush.msra.mxu0 0.0
    %261 = vmatpush.msra.mxu0 0.0
    %262 = vmatpush.msra.mxu0 0.0
    %263 = vmatpush.msra.mxu0 %v149
    %264 = vmatpush.msra.mxu0 %v146
    %265 = vmatmul.f32.gmra.mxu0 %v244
    %v266 = vpop.f32.mrf.mxu0
    %v267 = vadd.f32 %v241, %v266
    %268 = vmatmul.f32.gmra.mxu0 %v247
    %v269 = vpop.f32.mrf.mxu0
    %v270 = vadd.f32 %v241, %v269
    %271 = vdwg.mxu0
    %v272 = vmax.f32 %v267, 0.0
    %v273 = vmax.f32 %v270, 0.0
    %v274 = vld [vmem:[%s2] sm:$0xff]
    %v275 = vld [vmem:[%s2 + $0x8] sm:$0xff]
    %vm276 = vcmp.gt.f32.partialorder %v274, 0.0
    %vm277 = vcmp.gt.f32.partialorder %v275, 0.0
    %v278 = vsel %vm276, 1, 0
    %v279 = vsel %vm277, 1, 0
    %280 = vset.pattern.permute.xlu0 0
    %281 = vperm.xlu0 %280, %v278
    %v282 = vpop.permute.xlu0 %281
    %283 = vset.pattern.permute.xlu0 0
    %284 = vperm.xlu0 %283, %v279
    %v285 = vpop.permute.xlu0 %284
    %vm286 = vcmp.eq.s32.totalorder %v282, 1
    %vm287 = vcmp.eq.s32.totalorder %v285, 1
    %v288 = vsel %vm286, %v272, -1e+30
    %v289 = vsel %vm287, %v273, -1e+30
    %v290 = vsel %vm153, %v288, -inf
    %v291 = vsel %vm153, %v289, -inf
    %v292 = vmax.f32 %v290, %v291
    %v293 = vrot.slane %v292, 4
    %v294 = vmax.f32 %v292, %v293
    %v295 = vrot.slane %v294, 2
    %v296 = vmax.f32 %v294, %v295
    %v297 = vrot.slane %v296, 1
    %v298 = vmax.f32 %v296, %v297
    %299 = vset.pattern.permute.xlu0 1
    %300 = vperm.xlu0 %299, %v278
    %v301 = vpop.permute.xlu0 %300
    %302 = vset.pattern.permute.xlu0 1
    %303 = vperm.xlu0 %302, %v279
    %v304 = vpop.permute.xlu0 %303
    %vm305 = vcmp.eq.s32.totalorder %v301, 1
    %vm306 = vcmp.eq.s32.totalorder %v304, 1
    %v307 = vsel %vm305, %v272, -1e+30
    %v308 = vsel %vm306, %v273, -1e+30
    %v309 = vsel %vm153, %v307, -inf
    %v310 = vsel %vm153, %v308, -inf
    %v311 = vmax.f32 %v309, %v310
    %v312 = vrot.slane %v311, 4
    %v313 = vmax.f32 %v311, %v312
    %v314 = vrot.slane %v313, 2
    %v315 = vmax.f32 %v313, %v314
    %v316 = vrot.slane %v315, 1
    %v317 = vmax.f32 %v315, %v316
    %vm318 = vcmask 1040384
    %v319 = vsel %vm318, %v298, %v317
    %v320 = vld [vmem:[%s3] sm:$0x3]
    %v321 = vld [vmem:[#allocation7] sm:$0xff]
    %v322 = vld [vmem:[#allocation7 + $0x8] sm:$0xff]
    %v323 = vld [vmem:[%s9] sm:$0x1]
    %v325 = vperm.slane %v323, 0
    %v328 = vsel %vm121, %v320, 0
    %330 = vmatpush.msra.mxu0 0.0
    %331 = vmatpush.msra.mxu0 0.0
    %332 = vmatpush.msra.mxu0 0.0
    %333 = vmatpush.msra.mxu0 0.0
    %334 = vmatpush.msra.mxu0 0.0
    %335 = vmatpush.msra.mxu0 0.0
    %336 = vmatpush.msra.mxu0 0.0
    %337 = vmatpush.msra.mxu0 0.0
    %338 = vmatpush.msra.mxu0 0.0
    %339 = vmatpush.msra.mxu0 0.0
    %340 = vmatpush.msra.mxu0 0.0
    %341 = vmatpush.msra.mxu0 0.0
    %342 = vmatpush.msra.mxu0 0.0
    %343 = vmatpush.msra.mxu0 0.0
    %344 = vmatpush.msra.mxu0 %v322
    %345 = vmatpush.msra.mxu0 %v321
    %346 = vmatmul.f32.gmra.mxu0 %v328
    %v347 = vpop.f32.mrf.mxu0
    %v348 = vadd.f32 %v325, %v347
    %349 = vdwg.mxu0
    %v350 = vmax.f32 %v348, 0.0
    %v351 = vld [vmem:[%s10] sm:$0xff]
    %v352 = vld [vmem:[%s10 + $0x8] sm:$0xff]
    %v353 = vld [vmem:[%s10 + $0x10] sm:$0xff]
    %v354 = vld [vmem:[%s10 + $0x18] sm:$0xff]
    %v355 = vld [vmem:[#allocation8] sm:$0xff]
    %v356 = vld [vmem:[#allocation8 + $0x8] sm:$0xff]
    %v357 = vld [vmem:[#allocation8 + $0x10] sm:$0xff]
    %v358 = vld [vmem:[#allocation8 + $0x18] sm:$0xff]
    %v360 = vsel %vm153, %v350, 0
    %362 = vmatpush.msra.mxu0 0.0
    %363 = vmatpush.msra.mxu0 0.0
    %364 = vmatpush.msra.mxu0 0.0
    %365 = vmatpush.msra.mxu0 0.0
    %366 = vmatpush.msra.mxu0 0.0
    %367 = vmatpush.msra.mxu0 0.0
    %368 = vmatpush.msra.mxu0 0.0
    %369 = vmatpush.msra.mxu0 0.0
    %370 = vmatpush.msra.mxu0 0.0
    %371 = vmatpush.msra.mxu0 0.0
    %372 = vmatpush.msra.mxu0 0.0
    %373 = vmatpush.msra.mxu0 0.0
    %374 = vmatpush.msra.mxu0 %v358
    %375 = vmatpush.msra.mxu0 %v357
    %376 = vmatpush.msra.mxu0 %v356
    %377 = vmatpush.msra.mxu0 %v355
    %378 = vmatmul.f32.gmra.mxu0 %v360
    %v379 = vpop.f32.mrf.mxu0
    %v380 = vadd.f32 0.0, %v379
    %381 = vdwg.mxu0
    %v383 = vsel %vm153, %v319, 0
    %385 = vmatpush.msra.mxu0 0.0
    %386 = vmatpush.msra.mxu0 0.0
    %387 = vmatpush.msra.mxu0 0.0
    %388 = vmatpush.msra.mxu0 0.0
    %389 = vmatpush.msra.mxu0 0.0
    %390 = vmatpush.msra.mxu0 0.0
    %391 = vmatpush.msra.mxu0 0.0
    %392 = vmatpush.msra.mxu0 0.0
    %393 = vmatpush.msra.mxu0 0.0
    %394 = vmatpush.msra.mxu0 0.0
    %395 = vmatpush.msra.mxu0 0.0
    %396 = vmatpush.msra.mxu0 0.0
    %397 = vmatpush.msra.mxu0 %v354
    %398 = vmatpush.msra.mxu0 %v353
    %399 = vmatpush.msra.mxu0 %v352
    %400 = vmatpush.msra.mxu0 %v351
    %401 = vmatmul.f32.gmra.mxu0 %v383
    %v402 = vpop.f32.mrf.mxu0
    %v403 = vadd.f32 %v380, %v402
    %404 = vdwg.mxu0
    %v405 = vld [vmem:[%s12] sm:$0x1]
    %v407 = vperm.slane %v405, 0
    %v409 = vadd.f32 %v403, %v407
    %v410 = vmax.f32 %v409, 0.0
    %v411 = vld [vmem:[%s13] sm:$0xff]
    %v412 = vld [vmem:[%s13 + $0x8] sm:$0xff]
    %v413 = vld [vmem:[%s13 + $0x10] sm:$0xff]
    %v414 = vld [vmem:[%s13 + $0x18] sm:$0xff]
    %v415 = vld [vmem:[%s14] sm:$0x1]
    %v417 = vperm.slane %v415, 0
    %v420 = vsel %vm153, %v410, 0
    %422 = vmatpush.msra.mxu0 0.0
    %423 = vmatpush.msra.mxu0 0.0
    %424 = vmatpush.msra.mxu0 0.0
    %425 = vmatpush.msra.mxu0 0.0
    %426 = vmatpush.msra.mxu0 0.0
    %427 = vmatpush.msra.mxu0 0.0
    %428 = vmatpush.msra.mxu0 0.0
    %429 = vmatpush.msra.mxu0 0.0
    %430 = vmatpush.msra.mxu0 0.0
    %431 = vmatpush.msra.mxu0 0.0
    %432 = vmatpush.msra.mxu0 0.0
    %433 = vmatpush.msra.mxu0 0.0
    %434 = vmatpush.msra.mxu0 %v414
    %435 = vmatpush.msra.mxu0 %v413
    %436 = vmatpush.msra.mxu0 %v412
    %437 = vmatpush.msra.mxu0 %v411
    %438 = vmatmul.f32.gmra.mxu0 %v420
    %v439 = vpop.f32.mrf.mxu0
    %v440 = vadd.f32 %v417, %v439
    %441 = vdwg.mxu0
    %vm442 = vcmask 25600
    %v443 = vsel %vm442, %v440, -inf
    %444 = vmax.xlane.f32.xlu0 %v443
    %v445 = vpop.xlane.xlu0 %444
    %v446 = vsub.f32 %v440, %v445
    %v447 = vmul.f32 %v446, 1.442695
    %v448 = vpow.pop %v447
    %v449 = vsel %vm442, %v448, 0.0
    %450 = vadd.xlane.f32.xlu0 %v449
    %v451 = vpop.xlane.xlu0 %450
    %v452 = vlog2.pop %v451
    %v453 = vmul.f32 %v452, 0.6931472
    %v454 = vadd.f32 %v453, %v445
    %v455 = vsub.f32 %v440, %v454
    %456 = vst.msk [vmem:[#allocation10] sm:$0x3] %vm442, %v455
    // Predicated region
    $region78: #{gat_for_visualization.1} parent=1 // pred_check
      _
    $region79: #{gat_for_visualization.1} parent=1 // pred_check_branch
      %458 = sbr.rel (0) target = $region81
    $region80: #{gat_for_visualization.1} parent=1 // pred_region
      %460 = vsyncadd [#allocation4], 0
      %s462 = sshll.u32 [#allocation10], 4
      %s463 = int_to_ptr.vmem [resolvable:$true] %s462
      %s464 = sshll.u32 %s15, 4
      %s465 = int_to_ptr.hbm [resolvable:$true] %s464
      %467 = dma.vmem_to_hbm [thread:$0]  %s463, 32, %s465, [#allocation4]
    $region81: #{gat_for_visualization.1} parent=1 // pred_fallthru
      _
    // Predicated region
    $region82: #{gat_for_visualization.1} parent=1 // pred_check
      _
    $region83: #{gat_for_visualization.1} parent=1 // pred_check_branch
      %469 = sbr.rel (0) target = $region85
    $region84: #{gat_for_visualization.1} parent=1 // pred_region
      %471 = vsyncadd [#allocation12], 0
      %s472 = sshll.u32 [#allocation11], 4
      %s473 = int_to_ptr.vmem [resolvable:$true] %s472
      %s474 = sshll.u32 %s16, 4
      %s475 = int_to_ptr.hbm [resolvable:$true] %s474
      %480 = dma.vmem_to_hbm [thread:$0]  %s473, 256, %s475, [#allocation12], 128, 128, 8
    $region85: #{gat_for_visualization.1} parent=1 // pred_fallthru
      _
    // Predicated region
    $region86: #{gat_for_visualization.1} parent=1 // pred_check
      _
    $region87: #{gat_for_visualization.1} parent=1 // pred_check_branch
      %482 = sbr.rel (0) target = $region89
    $region88: #{gat_for_visualization.1} parent=1 // pred_region
      %484 = dma.done [#allocation4], 32
    $region89: #{gat_for_visualization.1} parent=1 // pred_fallthru
      _
    // Predicated region
    $region90: #{gat_for_visualization.1} parent=1 // pred_check
      _
    $region91: #{gat_for_visualization.1} parent=1 // pred_check_branch
      %486 = sbr.rel (0) target = $region93
    $region92: #{gat_for_visualization.1} parent=1 // pred_region
      %488 = dma.done [#allocation12], 256
    $region93: #{gat_for_visualization.1} parent=1 // pred_fallthru
      _
    %489 = vsyncpa [#allocation3], 1
    %490 = vsyncpa [#allocation6], 1
    %491 = vsyncpa [#allocation9], 1
    %492 = vsyncpa [#allocation4], 1
    %493 = vsyncpa [#allocation12], 1

</llo_original>
